<compile_context>
chip_gen: v7x
topology: tpu7x:2x2x1
jax: 0.10.0
libtpu: 0.0.40
codegen_flags: <defaults>
</compile_context>

<pallas_src>
import jax
import jax.numpy as jnp
from jax.experimental import pallas as pl
from jax.experimental.pallas import tpu as pltpu


def _round_up(n: int, m: int) -> int:
    return ((n + m - 1) // m) * m


# --------------------------------------------------------------------------
# Kernels
# --------------------------------------------------------------------------
def _intervention_kernel(x_ref, mask_ref, vals_ref, alpha_ref, w_ref, b_ref, o_ref):
    """Soft intervention on the first unit + fused affine chain."""
    x = x_ref[...]                                     # (tb, in_dim)
    alpha = jax.nn.sigmoid(alpha_ref[...])             # (1, in_dim), broadcasts
    m01 = (mask_ref[...] != 0.0).astype(jnp.float32)   # torch .bool() semantics
    # where(mask, (1-a)*x + a*v, x)  ==  x + a*mask*(v - x)
    h = x + (alpha * m01) * (vals_ref[...] - x)
    o_ref[...] = (jnp.dot(h, w_ref[...], preferred_element_type=jnp.float32)
                  + b_ref[...])


def _plain_kernel(x_ref, w_ref, b_ref, o_ref):
    """No-intervention fast path: just the fused affine map."""
    o_ref[...] = (jnp.dot(x_ref[...], w_ref[...],
                          preferred_element_type=jnp.float32)
                  + b_ref[...])


# --------------------------------------------------------------------------
# Parameter fusion (call ONCE per parameter set, outside the jitted forward)
# --------------------------------------------------------------------------
def fuse_linear_chain(params):
    """Collapse y = (((x@W0+b0)@W1+b1)...) into a single (W_total, b_total).

    Only valid because every unit has hidden_dim=None -> no activation between
    units (the nn.ReLU member is never applied in that configuration).
    """
    w_total = params[0][0].astype(jnp.float32)
    b_total = params[0][1].reshape(1, -1).astype(jnp.float32)
    for w, b in params[1:]:
        w = w.astype(jnp.float32)
        b = b.reshape(1, -1).astype(jnp.float32)
        w_total = jnp.dot(w_total, w, preferred_element_type=jnp.float32)
        b_total = jnp.dot(b_total, w, preferred_element_type=jnp.float32) + b
    return w_total, b_total


# --------------------------------------------------------------------------
# Forward wrapper
# --------------------------------------------------------------------------
def soft_intervention_network(x, w_total, b_total, alpha0,
                              do_mask=None, do_values=None,
                              *, batch_tile=256, out_tile=512):
    """
    x:         (batch, input_dim) float32
    w_total:   (input_dim, output_dim) fused weight (from fuse_linear_chain)
    b_total:   (1, output_dim) fused bias
    alpha0:    (input_dim,) raw alpha parameter of the FIRST unit
    do_mask:   optional (batch, input_dim) mask (nonzero => intervene)
    do_values: optional (batch, input_dim) intervention values
    """
    batch, in_dim = x.shape
    out_dim = w_total.shape[1]

    # ---- batch tiling (pad only when the batch spans multiple tiles) ----
    if batch <= batch_tile:
        tb, b_p = batch, batch            # full-dim block: no pad, no row slice
    else:
        n_bt = -(-batch // batch_tile)
        tb = _round_up(-(-batch // n_bt), 8)
        b_p = _round_up(batch, tb)
    n_batch_tiles = b_p // tb

    # ---- output-feature tiling (lane-dense store, bounded weight block) ----
    o_p = _round_up(out_dim, 128)
    if o_p <= out_tile:
        tn = o_p
    elif o_p % out_tile == 0:
        tn = out_tile
    elif o_p % 256 == 0:
        tn = 256
    else:
        tn = 128                          # always divides o_p (o_p % 128 == 0)
    n_out_tiles = o_p // tn

    # ---- padding (only where actually required) ----
    def pad_rows(a, rows):
        a = a.astype(jnp.float32)
        return a if a.shape[0] == rows else jnp.pad(a, ((0, rows - a.shape[0]), (0, 0)))

    def pad_cols(a, cols):
        a = a.astype(jnp.float32)
        return a if a.shape[1] == cols else jnp.pad(a, ((0, 0), (0, cols - a.shape[1])))

    x_in = pad_rows(x, b_p)
    w_in = pad_cols(w_total, o_p)
    b_in = pad_cols(b_total.reshape(1, -1), o_p)

    # ---- VMEM budget from the tile footprint (double-buffer + headroom) ----
    tile_bytes = 4 * (3 * tb * in_dim      # x, mask, vals tiles
                      + in_dim * tn        # weight block
                      + tn + in_dim        # bias + alpha
                      + tb * tn)           # output tile
    vmem_limit = max(32 * 1024 * 1024, min(4 * tile_bytes, 128 * 1024 * 1024))

    compiler_params = pltpu.CompilerParams(
        dimension_semantics=("parallel", "parallel"),   # megacore split on v7x
        vmem_limit_bytes=vmem_limit)

    out_shape = jax.ShapeDtypeStruct((b_p, o_p), jnp.float32)
    x_spec = pl.BlockSpec((tb, in_dim), lambda i, j: (i, 0))
    w_spec = pl.BlockSpec((in_dim, tn), lambda i, j: (0, j))
    b_spec = pl.BlockSpec((1, tn), lambda i, j: (0, j))
    o_spec = pl.BlockSpec((tb, tn), lambda i, j: (i, j))
    grid = (n_batch_tiles, n_out_tiles)

    if do_mask is None or do_values is None:
        # Matches PyTorch: intervention requires BOTH mask and values.
        out = pl.pallas_call(
            _plain_kernel,
            out_shape=out_shape,
            grid=grid,
            in_specs=[x_spec, w_spec, b_spec],
            out_specs=o_spec,
            compiler_params=compiler_params,
        )(x_in, w_in, b_in)
    else:
        mask_in = pad_rows(do_mask, b_p)
        vals_in = pad_rows(do_values, b_p)
        alpha_in = alpha0.reshape(1, -1).astype(jnp.float32)   # (1, in_dim), unpadded
        alpha_spec = pl.BlockSpec((1, in_dim), lambda i, j: (0, 0))

        out = pl.pallas_call(
            _intervention_kernel,
            out_shape=out_shape,
            grid=grid,
            in_specs=[x_spec, x_spec, x_spec, alpha_spec, w_spec, b_spec],
            out_specs=o_spec,
            compiler_params=compiler_params,
        )(x_in, mask_in, vals_in, alpha_in, w_in, b_in)

    # Slice the padded result back only when padding actually happened.
    if b_p != batch or o_p != out_dim:
        out = out[:batch, :out_dim]
    return out


# --------------------------------------------------------------------------
# Reference + test harness
# --------------------------------------------------------------------------
def _init_params(key, input_dim, hidden_dims, output_dim):
    """Parameter init mirroring the PyTorch __init__ (W ~ 0.1*N, b = 0)."""
    dims = [input_dim] + list(hidden_dims) + [output_dim]
    params = []
    for d_in, d_out in zip(dims[:-1], dims[1:]):
        key, wk = jax.random.split(key)
        w = 0.1 * jax.random.normal(wk, (d_in, d_out), dtype=jnp.float32)
        b = jnp.zeros((d_out,), dtype=jnp.float32)
        params.append((w, b))
    alpha0 = jnp.full((input_dim,), 0.5, dtype=jnp.float32)  # first unit's alpha
    return params, alpha0


def _reference(x, params, alpha0, do_mask=None, do_values=None):
    """Pure-JAX, layer-by-layer reference of the PyTorch forward pass."""
    h = x
    if do_mask is not None and do_values is not None:
        alpha = jax.nn.sigmoid(alpha0)[None, :]
        soft = (1.0 - alpha) * x + alpha * do_values
        h = jnp.where(do_mask != 0.0, soft, x)
    for w, b in params:
        h = h @ w + b
    return h


if __name__ == "__main__":
    input_dim, hidden_dims, output_dim = 16, [32, 32], 8
    batch = 8

    key = jax.random.PRNGKey(0)
    k_x, k_v, k_m, k_p = jax.random.split(key, 4)

    x = jax.random.normal(k_x, (batch, input_dim), dtype=jnp.float32)
    do_values = jax.random.normal(k_v, (batch, input_dim), dtype=jnp.float32)
    do_mask = (jax.random.uniform(k_m, (batch, input_dim)) > 0.5).astype(jnp.float32)

    params, alpha0 = _init_params(k_p, input_dim, hidden_dims, output_dim)

    # Fuse the activation-free affine chain ONCE, outside the jitted forward.
    w_total, b_total = fuse_linear_chain(params)
    w_total = jax.block_until_ready(w_total)
    b_total = jax.block_until_ready(b_total)

    fwd = jax.jit(soft_intervention_network)

    # Intervention path.
    out = jax.block_until_ready(fwd(x, w_total, b_total, alpha0, do_mask, do_values))
    ref = _reference(x, params, alpha0, do_mask, do_values)
    assert out.shape == (batch, output_dim)
    assert jnp.allclose(out, ref, atol=2e-5, rtol=2e-5), "mismatch (intervention)"

    # No-intervention fast path (matches PyTorch: needs BOTH mask and values).
    out2 = jax.block_until_ready(fwd(x, w_total, b_total, alpha0))
    ref2 = _reference(x, params, alpha0)
    assert out2.shape == (batch, output_dim)
    assert jnp.allclose(out2, ref2, atol=2e-5, rtol=2e-5), "mismatch (plain)"

    # TODO(synk): intervention_history / last_interventions bookkeeping and the
    # structure-learning adjacency logits (adj_logits / adj_temperature) are
    # Python-side state unused by the forward compute; not represented here.
    print("KERNEL_OK")
</pallas_src>

<mosaic_0001>
module attributes {stable_mosaic.version = 11 : i64} {
  func.func @_intervention_kernel(%arg0: i32, %arg1: i32, %arg2: memref<8x16xf32, #tpu.memory_space<vmem>>, %arg3: memref<8x16xf32, #tpu.memory_space<vmem>>, %arg4: memref<8x16xf32, #tpu.memory_space<vmem>>, %arg5: memref<1x16xf32, #tpu.memory_space<vmem>>, %arg6: memref<16x128xf32, #tpu.memory_space<vmem>>, %arg7: memref<1x128xf32, #tpu.memory_space<vmem>>, %arg8: memref<8x128xf32, #tpu.memory_space<vmem>>) attributes {dimension_semantics = [#tpu.dimension_semantics<parallel>, #tpu.dimension_semantics<parallel>], iteration_bounds = array<i64: 1, 1>, scalar_prefetch = 0 : i64, scratch_operands = 0 : i64, tpu.core_type = #tpu.core_type<tc>, window_params = [{transform_indices = @transform_0, window_bounds = array<i64: 8, 16>}, {transform_indices = @transform_1, window_bounds = array<i64: 8, 16>}, {transform_indices = @transform_2, window_bounds = array<i64: 8, 16>}, {pipeline_mode = #tpu.pipeline_mode<synchronous>, transform_indices = @transform_3, window_bounds = array<i64: 1, 16>}, {transform_indices = @transform_4, window_bounds = array<i64: 16, 128>}, {transform_indices = @transform_5, window_bounds = array<i64: 1, 128>}, {transform_indices = @transform_6, window_bounds = array<i64: 8, 128>}]} {
    %c0 = arith.constant 0 : index
    %c0_0 = arith.constant 0 : index
    %0 = vector.load %arg2[%c0, %c0_0] : memref<8x16xf32, #tpu.memory_space<vmem>>, vector<8x16xf32>
    %c0_1 = arith.constant 0 : index
    %c0_2 = arith.constant 0 : index
    %1 = vector.load %arg5[%c0_1, %c0_2] : memref<1x16xf32, #tpu.memory_space<vmem>>, vector<1x16xf32>
    %2 = arith.negf %1 : vector<1x16xf32>
    %3 = math.exp %2 : vector<1x16xf32>
    %cst = arith.constant 1.000000e+00 : f32
    %4 = vector.broadcast %cst : f32 to vector<1x16xf32>
    %5 = arith.addf %4, %3 : vector<1x16xf32>
    %6 = arith.divf %4, %5 : vector<1x16xf32>
    %c0_3 = arith.constant 0 : index
    %c0_4 = arith.constant 0 : index
    %7 = vector.load %arg3[%c0_3, %c0_4] : memref<8x16xf32, #tpu.memory_space<vmem>>, vector<8x16xf32>
    %cst_5 = arith.constant 0.000000e+00 : f32
    %8 = vector.broadcast %cst_5 : f32 to vector<8x16xf32>
    %9 = arith.cmpf one, %7, %8 : vector<8x16xf32>
    %10 = arith.extui %9 : vector<8x16xi1> to vector<8x16xi32>
    %11 = arith.sitofp %10 : vector<8x16xi32> to vector<8x16xf32>
    %12 = vector.broadcast %6 : vector<1x16xf32> to vector<8x16xf32>
    %13 = arith.mulf %12, %11 : vector<8x16xf32>
    %c0_6 = arith.constant 0 : index
    %c0_7 = arith.constant 0 : index
    %14 = vector.load %arg4[%c0_6, %c0_7] : memref<8x16xf32, #tpu.memory_space<vmem>>, vector<8x16xf32>
    %15 = arith.subf %14, %0 : vector<8x16xf32>
    %16 = arith.mulf %13, %15 : vector<8x16xf32>
    %17 = arith.addf %0, %16 : vector<8x16xf32>
    %c0_8 = arith.constant 0 : index
    %c0_9 = arith.constant 0 : index
    %18 = vector.load %arg6[%c0_8, %c0_9] : memref<16x128xf32, #tpu.memory_space<vmem>>, vector<16x128xf32>
    %cst_10 = arith.constant dense<0.000000e+00> : vector<8x128xf32>
    %19 = tpu.matmul %17, %18, %cst_10 {dimension_numbers = #tpu.dot_dimension_numbers<[1], [0], [0], [1], [0, 0, 1, 1], [], []>} : vector<8x16xf32>, vector<16x128xf32>, vector<8x128xf32> -> vector<8x128xf32>
    %c0_11 = arith.constant 0 : index
    %c0_12 = arith.constant 0 : index
    %20 = vector.load %arg7[%c0_11, %c0_12] : memref<1x128xf32, #tpu.memory_space<vmem>>, vector<1x128xf32>
    %21 = vector.broadcast %20 : vector<1x128xf32> to vector<8x128xf32>
    %22 = arith.addf %19, %21 : vector<8x128xf32>
    %c0_13 = arith.constant 0 : index
    %c0_14 = arith.constant 0 : index
    %23 = vector.load %arg8[%c0_13, %c0_14] : memref<8x128xf32, #tpu.memory_space<vmem>>, vector<8x128xf32>
    tpu.vector_store %arg8[%c0_13, %c0_14], %22 {strides = array<i32>} : memref<8x128xf32, #tpu.memory_space<vmem>>, vector<8x128xf32>,
    return
  }
  func.func @transform_0(%arg0: i32, %arg1: i32) -> (i32, i32) {
    %c0_i32 = arith.constant 0 : i32
    %c0_i32_0 = arith.constant 0 : i32
    return %arg0, %c0_i32 : i32, i32
  }
  func.func @transform_1(%arg0: i32, %arg1: i32) -> (i32, i32) {
    %c0_i32 = arith.constant 0 : i32
    %c0_i32_0 = arith.constant 0 : i32
    return %arg0, %c0_i32 : i32, i32
  }
  func.func @transform_2(%arg0: i32, %arg1: i32) -> (i32, i32) {
    %c0_i32 = arith.constant 0 : i32
    %c0_i32_0 = arith.constant 0 : i32
    return %arg0, %c0_i32 : i32, i32
  }
  func.func @transform_3(%arg0: i32, %arg1: i32) -> (i32, i32) {
    %c0_i32 = arith.constant 0 : i32
    %c0_i32_0 = arith.constant 0 : i32
    %c0_i32_1 = arith.constant 0 : i32
    return %c0_i32, %c0_i32_0 : i32, i32
  }
  func.func @transform_4(%arg0: i32, %arg1: i32) -> (i32, i32) {
    %c0_i32 = arith.constant 0 : i32
    %c0_i32_0 = arith.constant 0 : i32
    return %c0_i32, %arg1 : i32, i32
  }
  func.func @transform_5(%arg0: i32, %arg1: i32) -> (i32, i32) {
    %c0_i32 = arith.constant 0 : i32
    %c0_i32_0 = arith.constant 0 : i32
    return %c0_i32, %arg1 : i32, i32
  }
  func.func @transform_6(%arg0: i32, %arg1: i32) -> (i32, i32) {
    %c0_i32 = arith.constant 0 : i32
    return %arg0, %arg1 : i32, i32
  }
}

</mosaic_0001>

<llo_original>
// kernel: soft_intervention_network.1
$region0: #{soft_intervention_network.1}
  #allocation0 [shape = 'u32[]', space=smem, size = 0x4, offset = 0x4, fixed_abs, tag = 'smem constant byte address 0x4 - core index']
  #allocation1 [shape = 'u32[144,128]{1,0:T(1,128)}', space=vmem, size = 0x12000, scoped, tag = 'internal scratch']
  %s0 = inlined_call_operand.vmem [shape: f32[8,16], index: 0, kind: input, shape index: {}]
  %s1 = inlined_call_operand.vmem [shape: f32[8,16], index: 1, kind: input, shape index: {}]
  %s2 = inlined_call_operand.vmem [shape: f32[8,16], index: 2, kind: input, shape index: {}]
  %s3 = inlined_call_operand.vmem [shape: f32[1,16], index: 3, kind: input, shape index: {}]
  %s4 = inlined_call_operand.vmem [shape: f32[16,128], index: 4, kind: input, shape index: {}]
  %s5 = inlined_call_operand.vmem [shape: f32[1,128], index: 5, kind: input, shape index: {}]
  %s6 = inlined_call_operand.hbm [shape: f32[8,128], index: 6, kind: output, shape index: {}]
  %s7 = sld [smem:[#allocation0]]
  $region34: #{soft_intervention_network.1} parent=0
    _
  %s9 = ssub.s32 1, %s7
  %s10 = scalar_select 0, %s9, %s7
  $region1: #{soft_intervention_network.1} parent=0
    #allocation2 [shape = 'u8[4096]{0}', space=vmem, size = 0x1000, scoped, tag = 'output window, operand 0, single buffered']
    #allocation3 [shape = 's32[1]{0}', space=sflag, size = 0x4, scoped, tag = 'scoped memory for soft_intervention_network.1']
    %11 = vsyncpa [#allocation3], 0
    // Predicated region
    $region2: #{soft_intervention_network.1} parent=1 // pred_check
      _
    $region3: #{soft_intervention_network.1} parent=1 // pred_check_branch
      %13 = sbr.rel (0) target = $region5
    $region4: #{soft_intervention_network.1} parent=1 // pred_region
      _
    $region5: #{soft_intervention_network.1} parent=1 // pred_fallthru
      _
    // Predicated region
    $region6: #{soft_intervention_network.1} parent=1 // pred_check
      _
    $region7: #{soft_intervention_network.1} parent=1 // pred_check_branch
      %15 = sbr.rel (0) target = $region9
    $region8: #{soft_intervention_network.1} parent=1 // pred_region
      _
    $region9: #{soft_intervention_network.1} parent=1 // pred_fallthru
      _
    // Predicated region
    $region10: #{soft_intervention_network.1} parent=1 // pred_check
      _
    $region11: #{soft_intervention_network.1} parent=1 // pred_check_branch
      %17 = sbr.rel (0) target = $region13
    $region12: #{soft_intervention_network.1} parent=1 // pred_region
      _
    $region13: #{soft_intervention_network.1} parent=1 // pred_fallthru
      _
    // Predicated region
    $region14: #{soft_intervention_network.1} parent=1 // pred_check
      _
    $region15: #{soft_intervention_network.1} parent=1 // pred_check_branch
      %19 = sbr.rel (0) target = $region17
    $region16: #{soft_intervention_network.1} parent=1 // pred_region
      _
    $region17: #{soft_intervention_network.1} parent=1 // pred_fallthru
      _
    // Predicated region
    $region18: #{soft_intervention_network.1} parent=1 // pred_check
      _
    $region19: #{soft_intervention_network.1} parent=1 // pred_check_branch
      %21 = sbr.rel (0) target = $region21
    $region20: #{soft_intervention_network.1} parent=1 // pred_region
      _
    $region21: #{soft_intervention_network.1} parent=1 // pred_fallthru
      _
    // Predicated region
    $region22: #{soft_intervention_network.1} parent=1 // pred_check
      _
    $region23: #{soft_intervention_network.1} parent=1 // pred_check_branch
      %23 = sbr.rel (0) target = $region25
    $region24: #{soft_intervention_network.1} parent=1 // pred_region
      _
    $region25: #{soft_intervention_network.1} parent=1 // pred_fallthru
      _
    %v24 = vld [vmem:[%s0] sm:$0xff]
    %v25 = vld [vmem:[%s3] sm:$0x1]
    %v26 = vxor.u32 %v25, 2147483648
    %v27 = vmul.f32 %v26, 1.442695
    %v28 = vpow.pop %v27
    %v29 = vadd.f32 %v28, 1.0
    %v30 = vrcp.pop %v29
    %v31 = vmul.f32 1.0, %v30
    %v32 = vld [vmem:[%s1] sm:$0xff]
    %vm33 = vcmp.ne.f32.partialorder %v32, 0.0
    %v34 = vsel %vm33, 1, 0
    %v35 = vcvt.s32.f32 %v34
    %v37 = vlaneseq
    %v38 = vshrl.u32 %v37, 7
    %v39 = vsub.s32 0, %v38
    %v40 = vrot.slane %v31, %v39
    %v42 = vmul.f32 %v40, %v35
    %v43 = vld [vmem:[%s2] sm:$0xff]
    %v44 = vsub.f32 %v43, %v24
    %v45 = vmul.f32 %v42, %v44
    %v46 = vadd.f32 %v24, %v45
    %v47 = vld [vmem:[%s4] sm:$0xff]
    %v48 = vld [vmem:[%s4 + $0x8] sm:$0xff]
    %v49 = vld [vmem:[%s5] sm:$0x1]
    %v51 = vlaneseq
    %v52 = vshrl.u32 %v51, 7
    %v53 = vsub.s32 0, %v52
    %v54 = vrot.slane %v49, %v53
    %vm56 = vcmask 130048
    %v58 = vsel %vm56, %v46, 0
    %60 = vmatprep.subr.mxu0 0.0
    %61 = vmatpush1.msra.mxu0 %v47
    %62 = vmatprep.subr.mxu0 0.0
    %63 = vmatpush1.msra.mxu0 %v48
    %64 = vmatprep.subr.mxu0 0.0
    %65 = vmatpush1.msra.mxu0 0.0
    %66 = vmatprep.subr.mxu0 0.0
    %67 = vmatpush1.msra.mxu0 0.0
    %68 = vmatprep.subr.mxu0 0.0
    %69 = vmatpush1.msra.mxu0 0.0
    %70 = vmatprep.subr.mxu0 0.0
    %71 = vmatpush1.msra.mxu0 0.0
    %72 = vmatprep.subr.mxu0 0.0
    %73 = vmatpush1.msra.mxu0 0.0
    %74 = vmatprep.subr.mxu0 0.0
    %75 = vmatpush1.msra.mxu0 0.0
    %76 = vmatprep.subr.mxu0 0.0
    %77 = vmatpush1.msra.mxu0 0.0
    %78 = vmatprep.subr.mxu0 0.0
    %79 = vmatpush1.msra.mxu0 0.0
    %80 = vmatprep.subr.mxu0 0.0
    %81 = vmatpush1.msra.mxu0 0.0
    %82 = vmatprep.subr.mxu0 0.0
    %83 = vmatpush1.msra.mxu0 0.0
    %84 = vmatprep.subr.mxu0 0.0
    %85 = vmatpush1.msra.mxu0 0.0
    %86 = vmatprep.subr.mxu0 0.0
    %87 = vmatpush1.msra.mxu0 0.0
    %88 = vmatprep.subr.mxu0 0.0
    %89 = vmatpush1.msra.mxu0 0.0
    %90 = vmatprep.subr.mxu0 0.0
    %91 = vmatpush1.msra.mxu0 0.0
    %92 = vmatprep.subr.mxu0 0.0
    %93 = vmatpush1.msra.mxu0 0.0
    %94 = vmatprep.subr.mxu0 0.0
    %95 = vmatpush1.msra.mxu0 0.0
    %96 = vmatprep.subr.mxu0 0.0
    %97 = vmatpush1.msra.mxu0 0.0
    %98 = vmatprep.subr.mxu0 0.0
    %99 = vmatpush1.msra.mxu0 0.0
    %100 = vmatprep.subr.mxu0 0.0
    %101 = vmatpush1.msra.mxu0 0.0
    %102 = vmatprep.subr.mxu0 0.0
    %103 = vmatpush1.msra.mxu0 0.0
    %104 = vmatprep.subr.mxu0 0.0
    %105 = vmatpush1.msra.mxu0 0.0
    %106 = vmatprep.subr.mxu0 0.0
    %107 = vmatpush1.msra.mxu0 0.0
    %108 = vmatprep.subr.mxu0 0.0
    %109 = vmatpush1.msra.mxu0 0.0
    %110 = vmatprep.subr.mxu0 0.0
    %111 = vmatpush1.msra.mxu0 0.0
    %112 = vmatprep.subr.mxu0 0.0
    %113 = vmatpush1.msra.mxu0 0.0
    %114 = vmatprep.subr.mxu0 0.0
    %115 = vmatpush1.msra.mxu0 0.0
    %116 = vmatprep.subr.mxu0 0.0
    %117 = vmatpush1.msra.mxu0 0.0
    %118 = vmatprep.subr.mxu0 0.0
    %119 = vmatpush1.msra.mxu0 0.0
    %120 = vmatprep.subr.mxu0 0.0
    %121 = vmatpush1.msra.mxu0 0.0
    %122 = vmatprep.subr.mxu0 0.0
    %123 = vmatpush1.msra.mxu0 0.0
    %124 = vmatprep.mubr.f32.mxu0 0.0
    %125 = vmatmul.mubr.f32.gmra.mrb[0].mxu0 %v58
    %v126 = vpop.f32.mrb[0].mxu0
    %v127 = vadd.f32 %v54, %v126
    %v128 = vpop.f32.mrb[0].mxu0
    %129 = vdwg.mxu0
    %130 = vst [vmem:[#allocation2] sm:$0xff] %v127
    // Predicated region
    $region26: #{soft_intervention_network.1} parent=1 // pred_check
      _
    $region27: #{soft_intervention_network.1} parent=1 // pred_check_branch
      %132 = sbr.rel (0) target = $region29
    $region28: #{soft_intervention_network.1} parent=1 // pred_region
      %s134 = ssub.s32 128, 128
      %135 = vsyncadd [#allocation3], %s134
      %s137 = sshll.u32 [#allocation2], 4
      %s138 = int_to_ptr.vmem [resolvable:$true] %s137
      %140 = dma.vmem_to_hbm [thread:$0]  %s138, 128, %s6, [#allocation3]
    $region29: #{soft_intervention_network.1} parent=1 // pred_fallthru
      _
    // Predicated region
    $region30: #{soft_intervention_network.1} parent=1 // pred_check
      _
    $region31: #{soft_intervention_network.1} parent=1 // pred_check_branch
      %142 = sbr.rel (0) target = $region33
    $region32: #{soft_intervention_network.1} parent=1 // pred_region
      %143 = dma.done [#allocation3], 128
    $region33: #{soft_intervention_network.1} parent=1 // pred_fallthru
      _
    %144 = vsyncpa [#allocation3], 1

</llo_original>
